<compile_context>
chip_gen: v7x
topology: tpu7x:2x2x1
jax: 0.10.0
libtpu: 0.0.40
codegen_flags: <defaults>
</compile_context>

<pallas_src>
import functools

import jax
import jax.numpy as jnp
from jax.experimental import pallas as pl
from jax.experimental.pallas import tpu as pltpu


_VMEM_LIMIT_BYTES = 48 * 1024 * 1024   # explicit: scoped default is 16/32 MiB, v7x physical is 64 MiB
_VMEM_BUDGET_BYTES = 24 * 1024 * 1024  # budget for per-chunk buffers when auto-picking T_CHUNK


def _round_up(n, m):
    return ((n + m - 1) // m) * m


def _pick_t_chunk(seq_len, b_block, input_size, h_pad, x_bytes, out_bytes):
    """Largest time-chunk whose double-buffered blocks + f32 xw scratch fit the budget."""
    per_t = b_block * (
        2 * input_size * x_bytes      # x chunk, double-buffered
        + 2 * h_pad * out_bytes       # out chunk, double-buffered
        + h_pad * 4                   # f32 xw scratch (single copy)
    )
    t = max(1, _VMEM_BUDGET_BYTES // max(per_t, 1))
    return int(min(seq_len, t, 1024))


def rnn_kernel(x_ref, wx_ref, wh_ref, bh_ref, o_ref, h_ref, xw_ref, *, unroll):
    """One time-chunk of the Elman recurrence for one batch block.

    x_ref  : (T, Bb, I)      time-major input chunk            (VMEM, double-buffered)
    wx_ref : (I, Hp)         input projection (H zero-padded)   (VMEM, resident)
    wh_ref : (Hp, Hp)        recurrent weights (zero-padded)    (VMEM, resident)
    bh_ref : (1, Hp)         recurrent bias (zero-padded)       (VMEM, resident)
    o_ref  : (T, Bb, Hp)     hidden states for this chunk       (VMEM, double-buffered)
    h_ref  : (Bb, Hp) f32    hidden state carried across chunks (VMEM scratch)
    xw_ref : (T, Bb, Hp) f32 hoisted  x @ Wx + bh  per chunk    (VMEM scratch)
    """
    T, Bb, I = x_ref.shape
    Hp = wh_ref.shape[1]

    # h_0 = 0 at the first time-chunk of every batch block.
    @pl.when(pl.program_id(1) == 0)
    def _init():
        h_ref[...] = jnp.zeros_like(h_ref)

    # Hoisted input projection + bias: ONE (T*Bb, I) x (I, Hp) MXU matmul per chunk,
    # outside the serial recurrence.  (T, Bb) -> (T*Bb) merge is a tile-aligned no-op
    # reshape (Bb is a multiple of 8 sublanes).
    xw = (
        jnp.dot(x_ref[...].reshape(T * Bb, I), wx_ref[...],
                preferred_element_type=jnp.float32)
        + bh_ref[...].astype(jnp.float32)
    )
    xw_ref[...] = xw.reshape(T, Bb, Hp)

    # Serial recurrence: only  h @ Wh + tanh  sits on the critical path.
    def step(t, h):
        # Read Wh from VMEM each step (loads hide under the MXU, keeps vreg pressure low).
        pre = xw_ref[t] + jnp.dot(h, wh_ref[...], preferred_element_type=jnp.float32)
        h_new = jnp.tanh(pre)                       # (Bb, Hp) f32 ; padded lanes stay 0
        o_ref[t] = h_new.astype(o_ref.dtype)        # leading-axis store, lane-dense (Hp%128==0)
        return h_new                                # carried in vregs within the chunk

    h_final = jax.lax.fori_loop(0, T, step, h_ref[...], unroll=unroll)
    h_ref[...] = h_final                            # carry across chunks


def simple_rnn_forward(batch_x, Wx, Wh, bh, *, t_chunk=None, unroll=8):
    """batch_x: (B, S, I) -> rnn_out: (B, S, H).  Wx: (I, H), Wh: (H, H), bh: (H,)."""
    B, S, I = batch_x.shape
    H = Wh.shape[0]
    out_dtype = batch_x.dtype

    # ---- pad batch to a sublane multiple (8) and hidden to a lane multiple (128) ----
    B_pad = _round_up(B, 8)
    H_pad = _round_up(H, 128)

    # Batch-block split: leading "parallel" grid axis lets v7x's second TensorCore run
    # its own shard.  Each block stays a multiple of 8 sublanes.
    if B_pad % 16 == 0:
        b_block = B_pad // 2
    else:
        b_block = B_pad
    n_b_blocks = B_pad // b_block

    x_bytes = jnp.dtype(batch_x.dtype).itemsize
    o_bytes = jnp.dtype(out_dtype).itemsize
    if t_chunk is None:
        t_chunk = _pick_t_chunk(S, b_block, I, H_pad, x_bytes, o_bytes)
    t_chunk = max(1, min(int(t_chunk), S))
    S_pad = _round_up(S, t_chunk)
    n_chunks = S_pad // t_chunk

    # ---- zero-pad operands: padded hidden lanes stay exactly 0 through tanh ---------
    # (Wx columns, Wh rows AND columns, bh padded with zeros; padded batch rows and
    #  padded trailing timesteps are computed but sliced off.)
    x_p = jnp.zeros((B_pad, S_pad, I), batch_x.dtype).at[:B, :S, :].set(batch_x)
    # TODO(synk): at production sizes do this time-major swizzle in-kernel (or accept
    #             (S, B, .) layouts end-to-end) to avoid an extra HBM pass.
    x_tm = jnp.transpose(x_p, (1, 0, 2))                       # (S_pad, B_pad, I)

    Wx_p = jnp.zeros((I, H_pad), Wx.dtype).at[:, :H].set(Wx)
    Wh_p = jnp.zeros((H_pad, H_pad), Wh.dtype).at[:H, :H].set(Wh)
    bh_p = jnp.zeros((1, H_pad), jnp.float32).at[0, :H].set(
        jnp.reshape(bh, (-1,)).astype(jnp.float32))

    out_tm = pl.pallas_call(
        functools.partial(rnn_kernel, unroll=max(1, min(unroll, t_chunk))),
        out_shape=jax.ShapeDtypeStruct((S_pad, B_pad, H_pad), out_dtype),
        grid_spec=pltpu.PrefetchScalarGridSpec(
            num_scalar_prefetch=0,
            grid=(n_b_blocks, n_chunks),               # (parallel batch, serial time)
            in_specs=[
                pl.BlockSpec((t_chunk, b_block, I), lambda b, c: (c, b, 0)),    # x chunk
                pl.BlockSpec((I, H_pad), lambda b, c: (0, 0)),                  # Wx (resident)
                pl.BlockSpec((H_pad, H_pad), lambda b, c: (0, 0)),              # Wh (resident)
                pl.BlockSpec((1, H_pad), lambda b, c: (0, 0)),                  # bh (resident)
            ],
            out_specs=pl.BlockSpec((t_chunk, b_block, H_pad), lambda b, c: (c, b, 0)),
            scratch_shapes=[
                pltpu.VMEM((b_block, H_pad), jnp.float32),            # h carry across chunks
                pltpu.VMEM((t_chunk, b_block, H_pad), jnp.float32),   # hoisted x@Wx + bh
            ],
        ),
        compiler_params=pltpu.CompilerParams(
            # Time is inherently sequential ("arbitrary"); batch blocks are independent.
            dimension_semantics=("parallel", "arbitrary"),
            vmem_limit_bytes=_VMEM_LIMIT_BYTES,
        ),
    )(x_tm, Wx_p, Wh_p, bh_p)

    # TODO(synk): same layout note as above for the output transpose at production sizes.
    return jnp.transpose(out_tm, (1, 0, 2))[:B, :S, :H]


def simple_rnn_reference(batch_x, Wx, Wh, bh):
    """Pure-JAX reference (scan) for correctness checking."""
    B = batch_x.shape[0]
    H = Wh.shape[0]
    bh2 = jnp.reshape(bh, (1, H)).astype(jnp.float32)

    def step(h, x_t):
        h_new = jnp.tanh(x_t @ Wx + h @ Wh + bh2)
        return h_new, h_new

    h0 = jnp.zeros((B, H), jnp.float32)
    _, hs = jax.lax.scan(step, h0, jnp.transpose(batch_x, (1, 0, 2)).astype(jnp.float32))
    return jnp.transpose(hs, (1, 0, 2)).astype(batch_x.dtype)


if __name__ == "__main__":
    # Small shapes consistent with the module: batch=2, seq=8, input_size=16, hidden=32.
    B, S, I, H = 2, 8, 16, 32

    key = jax.random.PRNGKey(0)
    kx, kwx, kwh = jax.random.split(key, 3)

    batch_x = jax.random.normal(kx, (B, S, I), dtype=jnp.float32)
    Wx = jax.random.normal(kwx, (I, H), dtype=jnp.float32) * 0.1
    Wh = jax.random.normal(kwh, (H, H), dtype=jnp.float32) * 0.1
    bh = jnp.zeros((H,), dtype=jnp.float32)   # module: torch.zeros(hidden_size); `by` unused

    ref = simple_rnn_reference(batch_x, Wx, Wh, bh)

    # Default chunking (single chunk at this toy size).
    out1 = jax.block_until_ready(simple_rnn_forward(batch_x, Wx, Wh, bh))
    assert out1.shape == (B, S, H), out1.shape
    assert jnp.allclose(out1, ref, atol=1e-5, rtol=1e-5), "mismatch vs reference (default chunk)"

    # Multi-chunk path: exercises the cross-chunk hidden-state carry and time padding
    # (S=8, t_chunk=3 -> 3 chunks, S_pad=9).
    out2 = jax.block_until_ready(simple_rnn_forward(batch_x, Wx, Wh, bh, t_chunk=3))
    assert out2.shape == (B, S, H), out2.shape
    assert jnp.allclose(out2, ref, atol=1e-5, rtol=1e-5), "mismatch vs reference (chunked)"

    print("KERNEL_OK")
</pallas_src>

<mosaic_0001>
module attributes {stable_mosaic.version = 11 : i64} {
  func.func @rnn_kernel(%arg0: i32, %arg1: i32, %arg2: memref<8x8x16xf32, #tpu.memory_space<vmem>>, %arg3: memref<16x128xf32, #tpu.memory_space<vmem>>, %arg4: memref<128x128xf32, #tpu.memory_space<vmem>>, %arg5: memref<1x128xf32, #tpu.memory_space<vmem>>, %arg6: memref<8x8x128xf32, #tpu.memory_space<vmem>>, %arg7: memref<8x128xf32, #tpu.memory_space<vmem>>, %arg8: memref<8x8x128xf32, #tpu.memory_space<vmem>>) attributes {dimension_semantics = [#tpu.dimension_semantics<parallel>, #tpu.dimension_semantics<arbitrary>], iteration_bounds = array<i64: 1, 1>, scalar_prefetch = 0 : i64, scratch_operands = 2 : i64, tpu.core_type = #tpu.core_type<tc>, window_params = [{transform_indices = @transform_0, window_bounds = array<i64: 8, 8, 16>}, {pipeline_mode = #tpu.pipeline_mode<synchronous>, transform_indices = @transform_1, window_bounds = array<i64: 16, 128>}, {pipeline_mode = #tpu.pipeline_mode<synchronous>, transform_indices = @transform_2, window_bounds = array<i64: 128, 128>}, {pipeline_mode = #tpu.pipeline_mode<synchronous>, transform_indices = @transform_3, window_bounds = array<i64: 1, 128>}, {transform_indices = @transform_4, window_bounds = array<i64: 8, 8, 128>}]} {
    %c0_i32 = arith.constant 0 : i32
    %0 = arith.cmpi eq, %arg1, %c0_i32 : i32
    %1 = arith.extui %0 : i1 to i32
    %c0_i32_0 = arith.constant 0 : i32
    %2 = arith.cmpi ne, %1, %c0_i32_0 : i32
    scf.if %2 {
      %cst_71 = arith.constant 0.000000e+00 : f32
      %102 = vector.broadcast %cst_71 : f32 to vector<8x128xf32>
      %c0_72 = arith.constant 0 : index
      %c0_73 = arith.constant 0 : index
      %103 = vector.load %arg7[%c0_72, %c0_73] : memref<8x128xf32, #tpu.memory_space<vmem>>, vector<8x128xf32>
      tpu.vector_store %arg7[%c0_72, %c0_73], %102 {strides = array<i32>} : memref<8x128xf32, #tpu.memory_space<vmem>>, vector<8x128xf32>,
    } else {
    }
    %c0 = arith.constant 0 : index
    %c0_1 = arith.constant 0 : index
    %c0_2 = arith.constant 0 : index
    %3 = vector.load %arg2[%c0, %c0_1, %c0_2] : memref<8x8x16xf32, #tpu.memory_space<vmem>>, vector<8x8x16xf32>
    %4 = vector.shape_cast %3 : vector<8x8x16xf32> to vector<64x16xf32>
    %c0_3 = arith.constant 0 : index
    %c0_4 = arith.constant 0 : index
    %5 = vector.load %arg3[%c0_3, %c0_4] : memref<16x128xf32, #tpu.memory_space<vmem>>, vector<16x128xf32>
    %cst = arith.constant dense<0.000000e+00> : vector<64x128xf32>
    %6 = tpu.matmul %4, %5, %cst {dimension_numbers = #tpu.dot_dimension_numbers<[1], [0], [0], [1], [0, 0, 1, 1], [], []>} : vector<64x16xf32>, vector<16x128xf32>, vector<64x128xf32> -> vector<64x128xf32>
    %c0_5 = arith.constant 0 : index
    %c0_6 = arith.constant 0 : index
    %7 = vector.load %arg5[%c0_5, %c0_6] : memref<1x128xf32, #tpu.memory_space<vmem>>, vector<1x128xf32>
    %8 = vector.broadcast %7 : vector<1x128xf32> to vector<64x128xf32>
    %9 = arith.addf %6, %8 : vector<64x128xf32>
    %10 = vector.shape_cast %9 : vector<64x128xf32> to vector<8x8x128xf32>
    %c0_7 = arith.constant 0 : index
    %c0_8 = arith.constant 0 : index
    %c0_9 = arith.constant 0 : index
    %11 = vector.load %arg8[%c0_7, %c0_8, %c0_9] : memref<8x8x128xf32, #tpu.memory_space<vmem>>, vector<8x8x128xf32>
    tpu.vector_store %arg8[%c0_7, %c0_8, %c0_9], %10 {strides = array<i32>} : memref<8x8x128xf32, #tpu.memory_space<vmem>>, vector<8x8x128xf32>,
    %c0_10 = arith.constant 0 : index
    %c0_11 = arith.constant 0 : index
    %12 = vector.load %arg7[%c0_10, %c0_11] : memref<8x128xf32, #tpu.memory_space<vmem>>, vector<8x128xf32>
    %c0_i32_12 = arith.constant 0 : i32
    %13 = arith.index_cast %c0_i32_12 : i32 to index
    %c0_13 = arith.constant 0 : index
    %c0_14 = arith.constant 0 : index
    %14 = vector.load %arg8[%13, %c0_13, %c0_14] : memref<8x8x128xf32, #tpu.memory_space<vmem>>, vector<1x8x128xf32>
    %15 = vector.shape_cast %14 : vector<1x8x128xf32> to vector<8x128xf32>
    %c0_15 = arith.constant 0 : index
    %c0_16 = arith.constant 0 : index
    %16 = vector.load %arg4[%c0_15, %c0_16] : memref<128x128xf32, #tpu.memory_space<vmem>>, vector<128x128xf32>
    %cst_17 = arith.constant dense<0.000000e+00> : vector<8x128xf32>
    %17 = tpu.matmul %12, %16, %cst_17 {dimension_numbers = #tpu.dot_dimension_numbers<[1], [0], [0], [1], [0, 0, 1, 1], [], []>} : vector<8x128xf32>, vector<128x128xf32>, vector<8x128xf32> -> vector<8x128xf32>
    %18 = arith.addf %15, %17 : vector<8x128xf32>
    %19 = math.tanh %18 : vector<8x128xf32>
    %20 = arith.index_cast %c0_i32_12 : i32 to index
    %c0_18 = arith.constant 0 : index
    %c0_19 = arith.constant 0 : index
    %21 = vector.load %arg6[%20, %c0_18, %c0_19] : memref<8x8x128xf32, #tpu.memory_space<vmem>>, vector<1x8x128xf32>
    %22 = vector.shape_cast %21 : vector<1x8x128xf32> to vector<8x128xf32>
    %23 = vector.shape_cast %19 : vector<8x128xf32> to vector<1x8x128xf32>
    tpu.vector_store %arg6[%20, %c0_18, %c0_19], %23 {strides = array<i32>} : memref<8x8x128xf32, #tpu.memory_space<vmem>>, vector<1x8x128xf32>,
    %c1_i32 = arith.constant 1 : i32
    %24 = arith.index_cast %c1_i32 : i32 to index
    %c0_20 = arith.constant 0 : index
    %c0_21 = arith.constant 0 : index
    %25 = vector.load %arg8[%24, %c0_20, %c0_21] : memref<8x8x128xf32, #tpu.memory_space<vmem>>, vector<1x8x128xf32>
    %26 = vector.shape_cast %25 : vector<1x8x128xf32> to vector<8x128xf32>
    %c0_22 = arith.constant 0 : index
    %c0_23 = arith.constant 0 : index
    %27 = vector.load %arg4[%c0_22, %c0_23] : memref<128x128xf32, #tpu.memory_space<vmem>>, vector<128x128xf32>
    %cst_24 = arith.constant dense<0.000000e+00> : vector<8x128xf32>
    %28 = tpu.matmul %19, %27, %cst_24 {dimension_numbers = #tpu.dot_dimension_numbers<[1], [0], [0], [1], [0, 0, 1, 1], [], []>} : vector<8x128xf32>, vector<128x128xf32>, vector<8x128xf32> -> vector<8x128xf32>
    %29 = arith.addf %26, %28 : vector<8x128xf32>
    %30 = math.tanh %29 : vector<8x128xf32>
    %31 = arith.index_cast %c1_i32 : i32 to index
    %c0_25 = arith.constant 0 : index
    %c0_26 = arith.constant 0 : index
    %32 = vector.load %arg6[%31, %c0_25, %c0_26] : memref<8x8x128xf32, #tpu.memory_space<vmem>>, vector<1x8x128xf32>
    %33 = vector.shape_cast %32 : vector<1x8x128xf32> to vector<8x128xf32>
    %34 = vector.shape_cast %30 : vector<8x128xf32> to vector<1x8x128xf32>
    tpu.vector_store %arg6[%31, %c0_25, %c0_26], %34 {strides = array<i32>} : memref<8x8x128xf32, #tpu.memory_space<vmem>>, vector<1x8x128xf32>,
    %c2_i32 = arith.constant 2 : i32
    %35 = arith.index_cast %c2_i32 : i32 to index
    %c0_27 = arith.constant 0 : index
    %c0_28 = arith.constant 0 : index
    %36 = vector.load %arg8[%35, %c0_27, %c0_28] : memref<8x8x128xf32, #tpu.memory_space<vmem>>, vector<1x8x128xf32>
    %37 = vector.shape_cast %36 : vector<1x8x128xf32> to vector<8x128xf32>
    %c0_29 = arith.constant 0 : index
    %c0_30 = arith.constant 0 : index
    %38 = vector.load %arg4[%c0_29, %c0_30] : memref<128x128xf32, #tpu.memory_space<vmem>>, vector<128x128xf32>
    %cst_31 = arith.constant dense<0.000000e+00> : vector<8x128xf32>
    %39 = tpu.matmul %30, %38, %cst_31 {dimension_numbers = #tpu.dot_dimension_numbers<[1], [0], [0], [1], [0, 0, 1, 1], [], []>} : vector<8x128xf32>, vector<128x128xf32>, vector<8x128xf32> -> vector<8x128xf32>
    %40 = arith.addf %37, %39 : vector<8x128xf32>
    %41 = math.tanh %40 : vector<8x128xf32>
    %42 = arith.index_cast %c2_i32 : i32 to index
    %c0_32 = arith.constant 0 : index
    %c0_33 = arith.constant 0 : index
    %43 = vector.load %arg6[%42, %c0_32, %c0_33] : memref<8x8x128xf32, #tpu.memory_space<vmem>>, vector<1x8x128xf32>
    %44 = vector.shape_cast %43 : vector<1x8x128xf32> to vector<8x128xf32>
    %45 = vector.shape_cast %41 : vector<8x128xf32> to vector<1x8x128xf32>
    tpu.vector_store %arg6[%42, %c0_32, %c0_33], %45 {strides = array<i32>} : memref<8x8x128xf32, #tpu.memory_space<vmem>>, vector<1x8x128xf32>,
    %c3_i32 = arith.constant 3 : i32
    %46 = arith.index_cast %c3_i32 : i32 to index
    %c0_34 = arith.constant 0 : index
    %c0_35 = arith.constant 0 : index
    %47 = vector.load %arg8[%46, %c0_34, %c0_35] : memref<8x8x128xf32, #tpu.memory_space<vmem>>, vector<1x8x128xf32>
    %48 = vector.shape_cast %47 : vector<1x8x128xf32> to vector<8x128xf32>
    %c0_36 = arith.constant 0 : index
    %c0_37 = arith.constant 0 : index
    %49 = vector.load %arg4[%c0_36, %c0_37] : memref<128x128xf32, #tpu.memory_space<vmem>>, vector<128x128xf32>
    %cst_38 = arith.constant dense<0.000000e+00> : vector<8x128xf32>
    %50 = tpu.matmul %41, %49, %cst_38 {dimension_numbers = #tpu.dot_dimension_numbers<[1], [0], [0], [1], [0, 0, 1, 1], [], []>} : vector<8x128xf32>, vector<128x128xf32>, vector<8x128xf32> -> vector<8x128xf32>
    %51 = arith.addf %48, %50 : vector<8x128xf32>
    %52 = math.tanh %51 : vector<8x128xf32>
    %53 = arith.index_cast %c3_i32 : i32 to index
    %c0_39 = arith.constant 0 : index
    %c0_40 = arith.constant 0 : index
    %54 = vector.load %arg6[%53, %c0_39, %c0_40] : memref<8x8x128xf32, #tpu.memory_space<vmem>>, vector<1x8x128xf32>
    %55 = vector.shape_cast %54 : vector<1x8x128xf32> to vector<8x128xf32>
    %56 = vector.shape_cast %52 : vector<8x128xf32> to vector<1x8x128xf32>
    tpu.vector_store %arg6[%53, %c0_39, %c0_40], %56 {strides = array<i32>} : memref<8x8x128xf32, #tpu.memory_space<vmem>>, vector<1x8x128xf32>,
    %c4_i32 = arith.constant 4 : i32
    %57 = arith.index_cast %c4_i32 : i32 to index
    %c0_41 = arith.constant 0 : index
    %c0_42 = arith.constant 0 : index
    %58 = vector.load %arg8[%57, %c0_41, %c0_42] : memref<8x8x128xf32, #tpu.memory_space<vmem>>, vector<1x8x128xf32>
    %59 = vector.shape_cast %58 : vector<1x8x128xf32> to vector<8x128xf32>
    %c0_43 = arith.constant 0 : index
    %c0_44 = arith.constant 0 : index
    %60 = vector.load %arg4[%c0_43, %c0_44] : memref<128x128xf32, #tpu.memory_space<vmem>>, vector<128x128xf32>
    %cst_45 = arith.constant dense<0.000000e+00> : vector<8x128xf32>
    %61 = tpu.matmul %52, %60, %cst_45 {dimension_numbers = #tpu.dot_dimension_numbers<[1], [0], [0], [1], [0, 0, 1, 1], [], []>} : vector<8x128xf32>, vector<128x128xf32>, vector<8x128xf32> -> vector<8x128xf32>
    %62 = arith.addf %59, %61 : vector<8x128xf32>
    %63 = math.tanh %62 : vector<8x128xf32>
    %64 = arith.index_cast %c4_i32 : i32 to index
    %c0_46 = arith.constant 0 : index
    %c0_47 = arith.constant 0 : index
    %65 = vector.load %arg6[%64, %c0_46, %c0_47] : memref<8x8x128xf32, #tpu.memory_space<vmem>>, vector<1x8x128xf32>
    %66 = vector.shape_cast %65 : vector<1x8x128xf32> to vector<8x128xf32>
    %67 = vector.shape_cast %63 : vector<8x128xf32> to vector<1x8x128xf32>
    tpu.vector_store %arg6[%64, %c0_46, %c0_47], %67 {strides = array<i32>} : memref<8x8x128xf32, #tpu.memory_space<vmem>>, vector<1x8x128xf32>,
    %c5_i32 = arith.constant 5 : i32
    %68 = arith.index_cast %c5_i32 : i32 to index
    %c0_48 = arith.constant 0 : index
    %c0_49 = arith.constant 0 : index
    %69 = vector.load %arg8[%68, %c0_48, %c0_49] : memref<8x8x128xf32, #tpu.memory_space<vmem>>, vector<1x8x128xf32>
    %70 = vector.shape_cast %69 : vector<1x8x128xf32> to vector<8x128xf32>
    %c0_50 = arith.constant 0 : index
    %c0_51 = arith.constant 0 : index
    %71 = vector.load %arg4[%c0_50, %c0_51] : memref<128x128xf32, #tpu.memory_space<vmem>>, vector<128x128xf32>
    %cst_52 = arith.constant dense<0.000000e+00> : vector<8x128xf32>
    %72 = tpu.matmul %63, %71, %cst_52 {dimension_numbers = #tpu.dot_dimension_numbers<[1], [0], [0], [1], [0, 0, 1, 1], [], []>} : vector<8x128xf32>, vector<128x128xf32>, vector<8x128xf32> -> vector<8x128xf32>
    %73 = arith.addf %70, %72 : vector<8x128xf32>
    %74 = math.tanh %73 : vector<8x128xf32>
    %75 = arith.index_cast %c5_i32 : i32 to index
    %c0_53 = arith.constant 0 : index
    %c0_54 = arith.constant 0 : index
    %76 = vector.load %arg6[%75, %c0_53, %c0_54] : memref<8x8x128xf32, #tpu.memory_space<vmem>>, vector<1x8x128xf32>
    %77 = vector.shape_cast %76 : vector<1x8x128xf32> to vector<8x128xf32>
    %78 = vector.shape_cast %74 : vector<8x128xf32> to vector<1x8x128xf32>
    tpu.vector_store %arg6[%75, %c0_53, %c0_54], %78 {strides = array<i32>} : memref<8x8x128xf32, #tpu.memory_space<vmem>>, vector<1x8x128xf32>,
    %c6_i32 = arith.constant 6 : i32
    %79 = arith.index_cast %c6_i32 : i32 to index
    %c0_55 = arith.constant 0 : index
    %c0_56 = arith.constant 0 : index
    %80 = vector.load %arg8[%79, %c0_55, %c0_56] : memref<8x8x128xf32, #tpu.memory_space<vmem>>, vector<1x8x128xf32>
    %81 = vector.shape_cast %80 : vector<1x8x128xf32> to vector<8x128xf32>
    %c0_57 = arith.constant 0 : index
    %c0_58 = arith.constant 0 : index
    %82 = vector.load %arg4[%c0_57, %c0_58] : memref<128x128xf32, #tpu.memory_space<vmem>>, vector<128x128xf32>
    %cst_59 = arith.constant dense<0.000000e+00> : vector<8x128xf32>
    %83 = tpu.matmul %74, %82, %cst_59 {dimension_numbers = #tpu.dot_dimension_numbers<[1], [0], [0], [1], [0, 0, 1, 1], [], []>} : vector<8x128xf32>, vector<128x128xf32>, vector<8x128xf32> -> vector<8x128xf32>
    %84 = arith.addf %81, %83 : vector<8x128xf32>
    %85 = math.tanh %84 : vector<8x128xf32>
    %86 = arith.index_cast %c6_i32 : i32 to index
    %c0_60 = arith.constant 0 : index
    %c0_61 = arith.constant 0 : index
    %87 = vector.load %arg6[%86, %c0_60, %c0_61] : memref<8x8x128xf32, #tpu.memory_space<vmem>>, vector<1x8x128xf32>
    %88 = vector.shape_cast %87 : vector<1x8x128xf32> to vector<8x128xf32>
    %89 = vector.shape_cast %85 : vector<8x128xf32> to vector<1x8x128xf32>
    tpu.vector_store %arg6[%86, %c0_60, %c0_61], %89 {strides = array<i32>} : memref<8x8x128xf32, #tpu.memory_space<vmem>>, vector<1x8x128xf32>,
    %c7_i32 = arith.constant 7 : i32
    %90 = arith.index_cast %c7_i32 : i32 to index
    %c0_62 = arith.constant 0 : index
    %c0_63 = arith.constant 0 : index
    %91 = vector.load %arg8[%90, %c0_62, %c0_63] : memref<8x8x128xf32, #tpu.memory_space<vmem>>, vector<1x8x128xf32>
    %92 = vector.shape_cast %91 : vector<1x8x128xf32> to vector<8x128xf32>
    %c0_64 = arith.constant 0 : index
    %c0_65 = arith.constant 0 : index
    %93 = vector.load %arg4[%c0_64, %c0_65] : memref<128x128xf32, #tpu.memory_space<vmem>>, vector<128x128xf32>
    %cst_66 = arith.constant dense<0.000000e+00> : vector<8x128xf32>
    %94 = tpu.matmul %85, %93, %cst_66 {dimension_numbers = #tpu.dot_dimension_numbers<[1], [0], [0], [1], [0, 0, 1, 1], [], []>} : vector<8x128xf32>, vector<128x128xf32>, vector<8x128xf32> -> vector<8x128xf32>
    %95 = arith.addf %92, %94 : vector<8x128xf32>
    %96 = math.tanh %95 : vector<8x128xf32>
    %97 = arith.index_cast %c7_i32 : i32 to index
    %c0_67 = arith.constant 0 : index
    %c0_68 = arith.constant 0 : index
    %98 = vector.load %arg6[%97, %c0_67, %c0_68] : memref<8x8x128xf32, #tpu.memory_space<vmem>>, vector<1x8x128xf32>
    %99 = vector.shape_cast %98 : vector<1x8x128xf32> to vector<8x128xf32>
    %100 = vector.shape_cast %96 : vector<8x128xf32> to vector<1x8x128xf32>
    tpu.vector_store %arg6[%97, %c0_67, %c0_68], %100 {strides = array<i32>} : memref<8x8x128xf32, #tpu.memory_space<vmem>>, vector<1x8x128xf32>,
    %c8_i32 = arith.constant 8 : i32
    %c0_69 = arith.constant 0 : index
    %c0_70 = arith.constant 0 : index
    %101 = vector.load %arg7[%c0_69, %c0_70] : memref<8x128xf32, #tpu.memory_space<vmem>>, vector<8x128xf32>
    tpu.vector_store %arg7[%c0_69, %c0_70], %96 {strides = array<i32>} : memref<8x128xf32, #tpu.memory_space<vmem>>, vector<8x128xf32>,
    return
  }
  func.func @transform_0(%arg0: i32, %arg1: i32) -> (i32, i32, i32) {
    %c0_i32 = arith.constant 0 : i32
    %c0_i32_0 = arith.constant 0 : i32
    return %arg1, %arg0, %c0_i32 : i32, i32, i32
  }
  func.func @transform_1(%arg0: i32, %arg1: i32) -> (i32, i32) {
    %c0_i32 = arith.constant 0 : i32
    %c0_i32_0 = arith.constant 0 : i32
    %c0_i32_1 = arith.constant 0 : i32
    return %c0_i32, %c0_i32_0 : i32, i32
  }
  func.func @transform_2(%arg0: i32, %arg1: i32) -> (i32, i32) {
    %c0_i32 = arith.constant 0 : i32
    %c0_i32_0 = arith.constant 0 : i32
    %c0_i32_1 = arith.constant 0 : i32
    return %c0_i32, %c0_i32_0 : i32, i32
  }
  func.func @transform_3(%arg0: i32, %arg1: i32) -> (i32, i32) {
    %c0_i32 = arith.constant 0 : i32
    %c0_i32_0 = arith.constant 0 : i32
    %c0_i32_1 = arith.constant 0 : i32
    return %c0_i32, %c0_i32_0 : i32, i32
  }
  func.func @transform_4(%arg0: i32, %arg1: i32) -> (i32, i32, i32) {
    %c0_i32 = arith.constant 0 : i32
    %c0_i32_0 = arith.constant 0 : i32
    return %arg1, %arg0, %c0_i32 : i32, i32, i32
  }
}

</mosaic_0001>

<llo_original>
// kernel: tpu_custom_call.1
$region0: #{tpu_custom_call.1}
  #allocation0 [shape = 'u32[]', space=smem, size = 0x4, offset = 0x4, fixed_abs, tag = 'smem constant byte address 0x4 - core index']
  #allocation1 [shape = 'u32[144,128]{1,0:T(1,128)}', space=vmem, size = 0x12000, scoped, tag = 'internal scratch']
  #allocation2 [shape = 'f32[8,128]{1,0:T(8,128)}', space=vmem, size = 0x1000, scoped, tag = 'scratch operand']
  #allocation3 [shape = 'f32[8,8,128]{2,1,0:T(8,128)}', space=vmem, size = 0x8000, scoped, tag = 'scratch operand']
  %s0 = inlined_call_operand.hbm [shape: f32[8,8,16], index: 0, kind: input, shape index: {}]
  %s1 = inlined_call_operand.hbm [shape: f32[16,128], index: 1, kind: input, shape index: {}]
  %s2 = inlined_call_operand.hbm [shape: f32[128,128], index: 2, kind: input, shape index: {}]
  %s3 = inlined_call_operand.vmem [shape: f32[1,128], index: 3, kind: input, shape index: {}]
  %s4 = inlined_call_operand.hbm [shape: f32[8,8,128], index: 4, kind: output, shape index: {}]
  %s5 = sld [smem:[#allocation0]]
  $region42: #{tpu_custom_call.1} parent=0
    _
  %s7 = ssub.s32 1, %s5
  %s8 = scalar_select 0, %s7, %s5
  $region1: #{tpu_custom_call.1} parent=0
    #allocation4 [shape = 'u8[32768]{0}', space=vmem, size = 0x8000, scoped, tag = 'input window, operand 0, single buffered']
    #allocation5 [shape = 's32[1]{0}', space=sflag, size = 0x4, scoped, tag = 'scoped memory for tpu_custom_call.1']
    #allocation6 [shape = 's32[1]{0}', space=sflag, size = 0x4, scoped, tag = 'scoped memory for tpu_custom_call.1']
    #allocation7 [shape = 'u8[8192]{0}', space=vmem, size = 0x2000, scoped, tag = 'input window, operand 1, single buffered']
    #allocation8 [shape = 's32[1]{0}', space=sflag, size = 0x4, scoped, tag = 'scoped memory for tpu_custom_call.1']
    #allocation9 [shape = 'u8[65536]{0}', space=vmem, size = 0x10000, scoped, tag = 'input window, operand 2, single buffered']
    #allocation10 [shape = 'u8[32768]{0}', space=vmem, size = 0x8000, scoped, tag = 'output window, operand 0, single buffered']
    %9 = vsyncpa [#allocation5], 0
    %10 = vsyncpa [#allocation8], 0
    %11 = vsyncpa [#allocation6], 0
    // Predicated region
    $region2: #{tpu_custom_call.1} parent=1 // pred_check
      _
    $region3: #{tpu_custom_call.1} parent=1 // pred_check_branch
      %13 = sbr.rel (0) target = $region5
    $region4: #{tpu_custom_call.1} parent=1 // pred_region
      %s15 = ssub.s32 1024, 1024
      %16 = vsyncadd [#allocation5], %s15
      %s17 = sshll.u32 [#allocation4], 4
      %s18 = int_to_ptr.vmem [resolvable:$true] %s17
      %23 = dma.hbm_to_vmem [thread:$0]  %s0, 1024, %s18, [#allocation5], 128, 128, 8
    $region5: #{tpu_custom_call.1} parent=1 // pred_fallthru
      _
    // Predicated region
    $region6: #{tpu_custom_call.1} parent=1 // pred_check
      _
    $region7: #{tpu_custom_call.1} parent=1 // pred_check_branch
      %25 = sbr.rel (0) target = $region9
    $region8: #{tpu_custom_call.1} parent=1 // pred_region
      %s27 = ssub.s32 256, 256
      %28 = vsyncadd [#allocation8], %s27
      %s29 = sshll.u32 [#allocation7], 4
      %s30 = int_to_ptr.vmem [resolvable:$true] %s29
      %35 = dma.hbm_to_vmem [thread:$0]  %s1, 256, %s30, [#allocation8], 128, 128, 8
    $region9: #{tpu_custom_call.1} parent=1 // pred_fallthru
      _
    // Predicated region
    $region10: #{tpu_custom_call.1} parent=1 // pred_check
      _
    $region11: #{tpu_custom_call.1} parent=1 // pred_check_branch
      %37 = sbr.rel (0) target = $region13
    $region12: #{tpu_custom_call.1} parent=1 // pred_region
      %s39 = ssub.s32 2048, 2048
      %40 = vsyncadd [#allocation8], %s39
      %s41 = sshll.u32 [#allocation9], 4
      %s42 = int_to_ptr.vmem [resolvable:$true] %s41
      %47 = dma.hbm_to_vmem [thread:$0]  %s2, 2048, %s42, [#allocation8], 128, 128, 8
    $region13: #{tpu_custom_call.1} parent=1 // pred_fallthru
      _
    // Predicated region
    $region14: #{tpu_custom_call.1} parent=1 // pred_check
      _
    $region15: #{tpu_custom_call.1} parent=1 // pred_check_branch
      %49 = sbr.rel (0) target = $region17
    $region16: #{tpu_custom_call.1} parent=1 // pred_region
      _
    $region17: #{tpu_custom_call.1} parent=1 // pred_fallthru
      _
    // Predicated region
    $region18: #{tpu_custom_call.1} parent=1 // pred_check
      _
    $region19: #{tpu_custom_call.1} parent=1 // pred_check_branch
      %51 = sbr.rel (0) target = $region21
    $region20: #{tpu_custom_call.1} parent=1 // pred_region
      %52 = dma.done [#allocation5], 1024
    $region21: #{tpu_custom_call.1} parent=1 // pred_fallthru
      _
    // Predicated region
    $region22: #{tpu_custom_call.1} parent=1 // pred_check
      _
    $region23: #{tpu_custom_call.1} parent=1 // pred_check_branch
      %54 = sbr.rel (0) target = $region25
    $region24: #{tpu_custom_call.1} parent=1 // pred_region
      %55 = dma.done [#allocation8], 256
    $region25: #{tpu_custom_call.1} parent=1 // pred_fallthru
      _
    // Predicated region
    $region26: #{tpu_custom_call.1} parent=1 // pred_check
      _
    $region27: #{tpu_custom_call.1} parent=1 // pred_check_branch
      %57 = sbr.rel (0) target = $region29
    $region28: #{tpu_custom_call.1} parent=1 // pred_region
      %58 = dma.done [#allocation8], 2048
    $region29: #{tpu_custom_call.1} parent=1 // pred_fallthru
      _
    %p59 = scmp.eq.s32.totalorder 0, 0
    // Predicated region
    $region30: #{tpu_custom_call.1} parent=1 // pred_check
      %p60 = pneg %p59
    $region31: #{tpu_custom_call.1} parent=1 // pred_check_branch
      %62 = sbr.rel (%p60) target = $region33
    $region32: #{tpu_custom_call.1} parent=1 // pred_region
      %63 = vst [vmem:[#allocation2] sm:$0xff] 0.0
    $region33: #{tpu_custom_call.1} parent=1 // pred_fallthru
      _
    %v64 = vld [vmem:[#allocation4] sm:$0xff]
    %v65 = vld [vmem:[#allocation4 + $0x8] sm:$0xff]
    %v66 = vld [vmem:[#allocation4 + $0x10] sm:$0xff]
    %v67 = vld [vmem:[#allocation4 + $0x18] sm:$0xff]
    %v68 = vld [vmem:[#allocation4 + $0x20] sm:$0xff]
    %v69 = vld [vmem:[#allocation4 + $0x28] sm:$0xff]
    %v70 = vld [vmem:[#allocation4 + $0x30] sm:$0xff]
    %v71 = vld [vmem:[#allocation4 + $0x38] sm:$0xff]
    %v72 = vld [vmem:[#allocation7] sm:$0xff]
    %v73 = vld [vmem:[#allocation7 + $0x8] sm:$0xff]
    %v74 = vld [vmem:[%s3] sm:$0x1]
    %v76 = vlaneseq
    %v77 = vshrl.u32 %v76, 7
    %v78 = vsub.s32 0, %v77
    %v79 = vrot.slane %v74, %v78
    %vm81 = vcmask 130048
    %v83 = vsel %vm81, %v64, 0
    %v86 = vsel %vm81, %v65, 0
    %v89 = vsel %vm81, %v66, 0
    %v92 = vsel %vm81, %v67, 0
    %v95 = vsel %vm81, %v68, 0
    %v98 = vsel %vm81, %v69, 0
    %v101 = vsel %vm81, %v70, 0
    %v104 = vsel %vm81, %v71, 0
    %106 = vmatprep.subr.mxu0 0.0
    %107 = vmatpush1.msra.mxu0 %v72
    %108 = vmatprep.subr.mxu0 0.0
    %109 = vmatpush1.msra.mxu0 %v73
    %110 = vmatprep.subr.mxu0 0.0
    %111 = vmatpush1.msra.mxu0 0.0
    %112 = vmatprep.subr.mxu0 0.0
    %113 = vmatpush1.msra.mxu0 0.0
    %114 = vmatprep.subr.mxu0 0.0
    %115 = vmatpush1.msra.mxu0 0.0
    %116 = vmatprep.subr.mxu0 0.0
    %117 = vmatpush1.msra.mxu0 0.0
    %118 = vmatprep.subr.mxu0 0.0
    %119 = vmatpush1.msra.mxu0 0.0
    %120 = vmatprep.subr.mxu0 0.0
    %121 = vmatpush1.msra.mxu0 0.0
    %122 = vmatprep.subr.mxu0 0.0
    %123 = vmatpush1.msra.mxu0 0.0
    %124 = vmatprep.subr.mxu0 0.0
    %125 = vmatpush1.msra.mxu0 0.0
    %126 = vmatprep.subr.mxu0 0.0
    %127 = vmatpush1.msra.mxu0 0.0
    %128 = vmatprep.subr.mxu0 0.0
    %129 = vmatpush1.msra.mxu0 0.0
    %130 = vmatprep.subr.mxu0 0.0
    %131 = vmatpush1.msra.mxu0 0.0
    %132 = vmatprep.subr.mxu0 0.0
    %133 = vmatpush1.msra.mxu0 0.0
    %134 = vmatprep.subr.mxu0 0.0
    %135 = vmatpush1.msra.mxu0 0.0
    %136 = vmatprep.subr.mxu0 0.0
    %137 = vmatpush1.msra.mxu0 0.0
    %138 = vmatprep.subr.mxu0 0.0
    %139 = vmatpush1.msra.mxu0 0.0
    %140 = vmatprep.subr.mxu0 0.0
    %141 = vmatpush1.msra.mxu0 0.0
    %142 = vmatprep.subr.mxu0 0.0
    %143 = vmatpush1.msra.mxu0 0.0
    %144 = vmatprep.subr.mxu0 0.0
    %145 = vmatpush1.msra.mxu0 0.0
    %146 = vmatprep.subr.mxu0 0.0
    %147 = vmatpush1.msra.mxu0 0.0
    %148 = vmatprep.subr.mxu0 0.0
    %149 = vmatpush1.msra.mxu0 0.0
    %150 = vmatprep.subr.mxu0 0.0
    %151 = vmatpush1.msra.mxu0 0.0
    %152 = vmatprep.subr.mxu0 0.0
    %153 = vmatpush1.msra.mxu0 0.0
    %154 = vmatprep.subr.mxu0 0.0
    %155 = vmatpush1.msra.mxu0 0.0
    %156 = vmatprep.subr.mxu0 0.0
    %157 = vmatpush1.msra.mxu0 0.0
    %158 = vmatprep.subr.mxu0 0.0
    %159 = vmatpush1.msra.mxu0 0.0
    %160 = vmatprep.subr.mxu0 0.0
    %161 = vmatpush1.msra.mxu0 0.0
    %162 = vmatprep.subr.mxu0 0.0
    %163 = vmatpush1.msra.mxu0 0.0
    %164 = vmatprep.subr.mxu0 0.0
    %165 = vmatpush1.msra.mxu0 0.0
    %166 = vmatprep.subr.mxu0 0.0
    %167 = vmatpush1.msra.mxu0 0.0
    %168 = vmatprep.subr.mxu0 0.0
    %169 = vmatpush1.msra.mxu0 0.0
    %170 = vmatprep.mubr.f32.mxu0 0.0
    %171 = vmatmul.mubr.f32.gmra.mrb[0].mxu0 %v83
    %v172 = vpop.f32.mrb[0].mxu0
    %v173 = vadd.f32 %v79, %v172
    %v174 = vpop.f32.mrb[0].mxu0
    %175 = vmatprep.mubr.f32.mxu0 0.0
    %176 = vmatmul.mubr.f32.gmra.mrb[0].mxu0 %v86
    %v177 = vpop.f32.mrb[0].mxu0
    %v178 = vadd.f32 %v79, %v177
    %v179 = vpop.f32.mrb[0].mxu0
    %180 = vmatprep.mubr.f32.mxu0 0.0
    %181 = vmatmul.mubr.f32.gmra.mrb[0].mxu0 %v89
    %v182 = vpop.f32.mrb[0].mxu0
    %v183 = vadd.f32 %v79, %v182
    %v184 = vpop.f32.mrb[0].mxu0
    %185 = vmatprep.mubr.f32.mxu0 0.0
    %186 = vmatmul.mubr.f32.gmra.mrb[0].mxu0 %v92
    %v187 = vpop.f32.mrb[0].mxu0
    %v188 = vadd.f32 %v79, %v187
    %v189 = vpop.f32.mrb[0].mxu0
    %190 = vmatprep.mubr.f32.mxu0 0.0
    %191 = vmatmul.mubr.f32.gmra.mrb[0].mxu0 %v95
    %v192 = vpop.f32.mrb[0].mxu0
    %v193 = vadd.f32 %v79, %v192
    %v194 = vpop.f32.mrb[0].mxu0
    %195 = vmatprep.mubr.f32.mxu0 0.0
    %196 = vmatmul.mubr.f32.gmra.mrb[0].mxu0 %v98
    %v197 = vpop.f32.mrb[0].mxu0
    %v198 = vadd.f32 %v79, %v197
    %v199 = vpop.f32.mrb[0].mxu0
    %200 = vmatprep.mubr.f32.mxu0 0.0
    %201 = vmatmul.mubr.f32.gmra.mrb[0].mxu0 %v101
    %v202 = vpop.f32.mrb[0].mxu0
    %v203 = vadd.f32 %v79, %v202
    %v204 = vpop.f32.mrb[0].mxu0
    %205 = vmatprep.mubr.f32.mxu0 0.0
    %206 = vmatmul.mubr.f32.gmra.mrb[0].mxu0 %v104
    %v207 = vpop.f32.mrb[0].mxu0
    %v208 = vadd.f32 %v79, %v207
    %v209 = vpop.f32.mrb[0].mxu0
    %210 = vdwg.mxu0
    %211 = vst [vmem:[#allocation3] sm:$0xff] %v173
    %212 = vst [vmem:[#allocation3 + $0x8] sm:$0xff] %v178
    %213 = vst [vmem:[#allocation3 + $0x10] sm:$0xff] %v183
    %214 = vst [vmem:[#allocation3 + $0x18] sm:$0xff] %v188
    %215 = vst [vmem:[#allocation3 + $0x20] sm:$0xff] %v193
    %216 = vst [vmem:[#allocation3 + $0x28] sm:$0xff] %v198
    %217 = vst [vmem:[#allocation3 + $0x30] sm:$0xff] %v203
    %218 = vst [vmem:[#allocation3 + $0x38] sm:$0xff] %v208
    %v219 = vld [vmem:[#allocation2] sm:$0xff]
    %v220 = vld [vmem:[#allocation3] sm:$0xff]
    %v221 = vld [vmem:[#allocation9] sm:$0xff]
    %v222 = vld [vmem:[#allocation9 + $0x8] sm:$0xff]
    %v223 = vld [vmem:[#allocation9 + $0x10] sm:$0xff]
    %v224 = vld [vmem:[#allocation9 + $0x18] sm:$0xff]
    %v225 = vld [vmem:[#allocation9 + $0x20] sm:$0xff]
    %v226 = vld [vmem:[#allocation9 + $0x28] sm:$0xff]
    %v227 = vld [vmem:[#allocation9 + $0x30] sm:$0xff]
    %v228 = vld [vmem:[#allocation9 + $0x38] sm:$0xff]
    %v229 = vld [vmem:[#allocation9 + $0x40] sm:$0xff]
    %v230 = vld [vmem:[#allocation9 + $0x48] sm:$0xff]
    %v231 = vld [vmem:[#allocation9 + $0x50] sm:$0xff]
    %v232 = vld [vmem:[#allocation9 + $0x58] sm:$0xff]
    %v233 = vld [vmem:[#allocation9 + $0x60] sm:$0xff]
    %v234 = vld [vmem:[#allocation9 + $0x68] sm:$0xff]
    %v235 = vld [vmem:[#allocation9 + $0x70] sm:$0xff]
    %v236 = vld [vmem:[#allocation9 + $0x78] sm:$0xff]
    %237 = vmatprep.subr.mxu0 0.0
    %238 = vmatpush1.msra.mxu0 %v221
    %239 = vmatprep.subr.mxu0 0.0
    %240 = vmatpush1.msra.mxu0 %v222
    %241 = vmatprep.subr.mxu0 0.0
    %242 = vmatpush1.msra.mxu0 %v223
    %243 = vmatprep.subr.mxu0 0.0
    %244 = vmatpush1.msra.mxu0 %v224
    %245 = vmatprep.subr.mxu0 0.0
    %246 = vmatpush1.msra.mxu0 %v225
    %247 = vmatprep.subr.mxu0 0.0
    %248 = vmatpush1.msra.mxu0 %v226
    %249 = vmatprep.subr.mxu0 0.0
    %250 = vmatpush1.msra.mxu0 %v227
    %251 = vmatprep.subr.mxu0 0.0
    %252 = vmatpush1.msra.mxu0 %v228
    %253 = vmatprep.subr.mxu0 0.0
    %254 = vmatpush1.msra.mxu0 %v229
    %255 = vmatprep.subr.mxu0 0.0
    %256 = vmatpush1.msra.mxu0 %v230
    %257 = vmatprep.subr.mxu0 0.0
    %258 = vmatpush1.msra.mxu0 %v231
    %259 = vmatprep.subr.mxu0 0.0
    %260 = vmatpush1.msra.mxu0 %v232
    %261 = vmatprep.subr.mxu0 0.0
    %262 = vmatpush1.msra.mxu0 %v233
    %263 = vmatprep.subr.mxu0 0.0
    %264 = vmatpush1.msra.mxu0 %v234
    %265 = vmatprep.subr.mxu0 0.0
    %266 = vmatpush1.msra.mxu0 %v235
    %267 = vmatprep.subr.mxu0 0.0
    %268 = vmatpush1.msra.mxu0 %v236
    %269 = vmatprep.subr.mxu0 0.0
    %270 = vmatpush1.msra.mxu0 0.0
    %271 = vmatprep.subr.mxu0 0.0
    %272 = vmatpush1.msra.mxu0 0.0
    %273 = vmatprep.subr.mxu0 0.0
    %274 = vmatpush1.msra.mxu0 0.0
    %275 = vmatprep.subr.mxu0 0.0
    %276 = vmatpush1.msra.mxu0 0.0
    %277 = vmatprep.subr.mxu0 0.0
    %278 = vmatpush1.msra.mxu0 0.0
    %279 = vmatprep.subr.mxu0 0.0
    %280 = vmatpush1.msra.mxu0 0.0
    %281 = vmatprep.subr.mxu0 0.0
    %282 = vmatpush1.msra.mxu0 0.0
    %283 = vmatprep.subr.mxu0 0.0
    %284 = vmatpush1.msra.mxu0 0.0
    %285 = vmatprep.subr.mxu0 0.0
    %286 = vmatpush1.msra.mxu0 0.0
    %287 = vmatprep.subr.mxu0 0.0
    %288 = vmatpush1.msra.mxu0 0.0
    %289 = vmatprep.subr.mxu0 0.0
    %290 = vmatpush1.msra.mxu0 0.0
    %291 = vmatprep.subr.mxu0 0.0
    %292 = vmatpush1.msra.mxu0 0.0
    %293 = vmatprep.subr.mxu0 0.0
    %294 = vmatpush1.msra.mxu0 0.0
    %295 = vmatprep.subr.mxu0 0.0
    %296 = vmatpush1.msra.mxu0 0.0
    %297 = vmatprep.subr.mxu0 0.0
    %298 = vmatpush1.msra.mxu0 0.0
    %299 = vmatprep.subr.mxu0 0.0
    %300 = vmatpush1.msra.mxu0 0.0
    %301 = vmatprep.mubr.f32.mxu0 0.0
    %302 = vmatmul.mubr.f32.gmra.mrb[0].mxu0 %v219
    %v303 = vpop.f32.mrb[0].mxu0
    %v304 = vadd.f32 0.0, %v303
    %v305 = vpop.f32.mrb[0].mxu0
    %306 = vdwg.mxu0
    %v307 = vadd.f32 %v220, %v304
    %v308 = vtanh.pop %v307
    %309 = vst [vmem:[#allocation10] sm:$0xff] %v308
    %s310 = scalar_lea.vmem [#allocation3], 8
    %v311 = vld [vmem:[%s310] sm:$0xff]
    %v312 = vld [vmem:[#allocation9] sm:$0xff]
    %v313 = vld [vmem:[#allocation9 + $0x8] sm:$0xff]
    %v314 = vld [vmem:[#allocation9 + $0x10] sm:$0xff]
    %v315 = vld [vmem:[#allocation9 + $0x18] sm:$0xff]
    %v316 = vld [vmem:[#allocation9 + $0x20] sm:$0xff]
    %v317 = vld [vmem:[#allocation9 + $0x28] sm:$0xff]
    %v318 = vld [vmem:[#allocation9 + $0x30] sm:$0xff]
    %v319 = vld [vmem:[#allocation9 + $0x38] sm:$0xff]
    %v320 = vld [vmem:[#allocation9 + $0x40] sm:$0xff]
    %v321 = vld [vmem:[#allocation9 + $0x48] sm:$0xff]
    %v322 = vld [vmem:[#allocation9 + $0x50] sm:$0xff]
    %v323 = vld [vmem:[#allocation9 + $0x58] sm:$0xff]
    %v324 = vld [vmem:[#allocation9 + $0x60] sm:$0xff]
    %v325 = vld [vmem:[#allocation9 + $0x68] sm:$0xff]
    %v326 = vld [vmem:[#allocation9 + $0x70] sm:$0xff]
    %v327 = vld [vmem:[#allocation9 + $0x78] sm:$0xff]
    %328 = vmatprep.subr.mxu0 0.0
    %329 = vmatpush1.msra.mxu0 %v312
    %330 = vmatprep.subr.mxu0 0.0
    %331 = vmatpush1.msra.mxu0 %v313
    %332 = vmatprep.subr.mxu0 0.0
    %333 = vmatpush1.msra.mxu0 %v314
    %334 = vmatprep.subr.mxu0 0.0
    %335 = vmatpush1.msra.mxu0 %v315
    %336 = vmatprep.subr.mxu0 0.0
    %337 = vmatpush1.msra.mxu0 %v316
    %338 = vmatprep.subr.mxu0 0.0
    %339 = vmatpush1.msra.mxu0 %v317
    %340 = vmatprep.subr.mxu0 0.0
    %341 = vmatpush1.msra.mxu0 %v318
    %342 = vmatprep.subr.mxu0 0.0
    %343 = vmatpush1.msra.mxu0 %v319
    %344 = vmatprep.subr.mxu0 0.0
    %345 = vmatpush1.msra.mxu0 %v320
    %346 = vmatprep.subr.mxu0 0.0
    %347 = vmatpush1.msra.mxu0 %v321
    %348 = vmatprep.subr.mxu0 0.0
    %349 = vmatpush1.msra.mxu0 %v322
    %350 = vmatprep.subr.mxu0 0.0
    %351 = vmatpush1.msra.mxu0 %v323
    %352 = vmatprep.subr.mxu0 0.0
    %353 = vmatpush1.msra.mxu0 %v324
    %354 = vmatprep.subr.mxu0 0.0
    %355 = vmatpush1.msra.mxu0 %v325
    %356 = vmatprep.subr.mxu0 0.0
    %357 = vmatpush1.msra.mxu0 %v326
    %358 = vmatprep.subr.mxu0 0.0
    %359 = vmatpush1.msra.mxu0 %v327
    %360 = vmatprep.subr.mxu0 0.0
    %361 = vmatpush1.msra.mxu0 0.0
    %362 = vmatprep.subr.mxu0 0.0
    %363 = vmatpush1.msra.mxu0 0.0
    %364 = vmatprep.subr.mxu0 0.0
    %365 = vmatpush1.msra.mxu0 0.0
    %366 = vmatprep.subr.mxu0 0.0
    %367 = vmatpush1.msra.mxu0 0.0
    %368 = vmatprep.subr.mxu0 0.0
    %369 = vmatpush1.msra.mxu0 0.0
    %370 = vmatprep.subr.mxu0 0.0
    %371 = vmatpush1.msra.mxu0 0.0
    %372 = vmatprep.subr.mxu0 0.0
    %373 = vmatpush1.msra.mxu0 0.0
    %374 = vmatprep.subr.mxu0 0.0
    %375 = vmatpush1.msra.mxu0 0.0
    %376 = vmatprep.subr.mxu0 0.0
    %377 = vmatpush1.msra.mxu0 0.0
    %378 = vmatprep.subr.mxu0 0.0
    %379 = vmatpush1.msra.mxu0 0.0
    %380 = vmatprep.subr.mxu0 0.0
    %381 = vmatpush1.msra.mxu0 0.0
    %382 = vmatprep.subr.mxu0 0.0
    %383 = vmatpush1.msra.mxu0 0.0
    %384 = vmatprep.subr.mxu0 0.0
    %385 = vmatpush1.msra.mxu0 0.0
    %386 = vmatprep.subr.mxu0 0.0
    %387 = vmatpush1.msra.mxu0 0.0
    %388 = vmatprep.subr.mxu0 0.0
    %389 = vmatpush1.msra.mxu0 0.0
    %390 = vmatprep.subr.mxu0 0.0
    %391 = vmatpush1.msra.mxu0 0.0
    %392 = vmatprep.mubr.f32.mxu0 0.0
    %393 = vmatmul.mubr.f32.gmra.mrb[0].mxu0 %v308
    %v394 = vpop.f32.mrb[0].mxu0
    %v395 = vadd.f32 0.0, %v394
    %v396 = vpop.f32.mrb[0].mxu0
    %397 = vdwg.mxu0
    %v398 = vadd.f32 %v311, %v395
    %v399 = vtanh.pop %v398
    %s400 = scalar_lea.vmem [#allocation10], 8
    %401 = vst [vmem:[%s400] sm:$0xff] %v399
    %s402 = scalar_lea.vmem [#allocation3], 16
    %v403 = vld [vmem:[%s402] sm:$0xff]
    %v404 = vld [vmem:[#allocation9] sm:$0xff]
    %v405 = vld [vmem:[#allocation9 + $0x8] sm:$0xff]
    %v406 = vld [vmem:[#allocation9 + $0x10] sm:$0xff]
    %v407 = vld [vmem:[#allocation9 + $0x18] sm:$0xff]
    %v408 = vld [vmem:[#allocation9 + $0x20] sm:$0xff]
    %v409 = vld [vmem:[#allocation9 + $0x28] sm:$0xff]
    %v410 = vld [vmem:[#allocation9 + $0x30] sm:$0xff]
    %v411 = vld [vmem:[#allocation9 + $0x38] sm:$0xff]
    %v412 = vld [vmem:[#allocation9 + $0x40] sm:$0xff]
    %v413 = vld [vmem:[#allocation9 + $0x48] sm:$0xff]
    %v414 = vld [vmem:[#allocation9 + $0x50] sm:$0xff]
    %v415 = vld [vmem:[#allocation9 + $0x58] sm:$0xff]
    %v416 = vld [vmem:[#allocation9 + $0x60] sm:$0xff]
    %v417 = vld [vmem:[#allocation9 + $0x68] sm:$0xff]
    %v418 = vld [vmem:[#allocation9 + $0x70] sm:$0xff]
    %v419 = vld [vmem:[#allocation9 + $0x78] sm:$0xff]
    %420 = vmatprep.subr.mxu0 0.0
    %421 = vmatpush1.msra.mxu0 %v404
    %422 = vmatprep.subr.mxu0 0.0
    %423 = vmatpush1.msra.mxu0 %v405
    %424 = vmatprep.subr.mxu0 0.0
    %425 = vmatpush1.msra.mxu0 %v406
    %426 = vmatprep.subr.mxu0 0.0
    %427 = vmatpush1.msra.mxu0 %v407
    %428 = vmatprep.subr.mxu0 0.0
    %429 = vmatpush1.msra.mxu0 %v408
    %430 = vmatprep.subr.mxu0 0.0
    %431 = vmatpush1.msra.mxu0 %v409
    %432 = vmatprep.subr.mxu0 0.0
    %433 = vmatpush1.msra.mxu0 %v410
    %434 = vmatprep.subr.mxu0 0.0
    %435 = vmatpush1.msra.mxu0 %v411
    %436 = vmatprep.subr.mxu0 0.0
    %437 = vmatpush1.msra.mxu0 %v412
    %438 = vmatprep.subr.mxu0 0.0
    %439 = vmatpush1.msra.mxu0 %v413
    %440 = vmatprep.subr.mxu0 0.0
    %441 = vmatpush1.msra.mxu0 %v414
    %442 = vmatprep.subr.mxu0 0.0
    %443 = vmatpush1.msra.mxu0 %v415
    %444 = vmatprep.subr.mxu0 0.0
    %445 = vmatpush1.msra.mxu0 %v416
    %446 = vmatprep.subr.mxu0 0.0
    %447 = vmatpush1.msra.mxu0 %v417
    %448 = vmatprep.subr.mxu0 0.0
    %449 = vmatpush1.msra.mxu0 %v418
    %450 = vmatprep.subr.mxu0 0.0
    %451 = vmatpush1.msra.mxu0 %v419
    %452 = vmatprep.subr.mxu0 0.0
    %453 = vmatpush1.msra.mxu0 0.0
    %454 = vmatprep.subr.mxu0 0.0
    %455 = vmatpush1.msra.mxu0 0.0
    %456 = vmatprep.subr.mxu0 0.0
    %457 = vmatpush1.msra.mxu0 0.0
    %458 = vmatprep.subr.mxu0 0.0
    %459 = vmatpush1.msra.mxu0 0.0
    %460 = vmatprep.subr.mxu0 0.0
    %461 = vmatpush1.msra.mxu0 0.0
    %462 = vmatprep.subr.mxu0 0.0
    %463 = vmatpush1.msra.mxu0 0.0
    %464 = vmatprep.subr.mxu0 0.0
    %465 = vmatpush1.msra.mxu0 0.0
    %466 = vmatprep.subr.mxu0 0.0
    %467 = vmatpush1.msra.mxu0 0.0
    %468 = vmatprep.subr.mxu0 0.0
    %469 = vmatpush1.msra.mxu0 0.0
    %470 = vmatprep.subr.mxu0 0.0
    %471 = vmatpush1.msra.mxu0 0.0
    %472 = vmatprep.subr.mxu0 0.0
    %473 = vmatpush1.msra.mxu0 0.0
    %474 = vmatprep.subr.mxu0 0.0
    %475 = vmatpush1.msra.mxu0 0.0
    %476 = vmatprep.subr.mxu0 0.0
    %477 = vmatpush1.msra.mxu0 0.0
    %478 = vmatprep.subr.mxu0 0.0
    %479 = vmatpush1.msra.mxu0 0.0
    %480 = vmatprep.subr.mxu0 0.0
    %481 = vmatpush1.msra.mxu0 0.0
    %482 = vmatprep.subr.mxu0 0.0
    %483 = vmatpush1.msra.mxu0 0.0
    %484 = vmatprep.mubr.f32.mxu0 0.0
    %485 = vmatmul.mubr.f32.gmra.mrb[0].mxu0 %v399
    %v486 = vpop.f32.mrb[0].mxu0
    %v487 = vadd.f32 0.0, %v486
    %v488 = vpop.f32.mrb[0].mxu0
    %489 = vdwg.mxu0
    %v490 = vadd.f32 %v403, %v487
    %v491 = vtanh.pop %v490
    %s492 = scalar_lea.vmem [#allocation10], 16
    %493 = vst [vmem:[%s492] sm:$0xff] %v491
    %s494 = scalar_lea.vmem [#allocation3], 24
    %v495 = vld [vmem:[%s494] sm:$0xff]
    %v496 = vld [vmem:[#allocation9] sm:$0xff]
    %v497 = vld [vmem:[#allocation9 + $0x8] sm:$0xff]
    %v498 = vld [vmem:[#allocation9 + $0x10] sm:$0xff]
    %v499 = vld [vmem:[#allocation9 + $0x18] sm:$0xff]
    %v500 = vld [vmem:[#allocation9 + $0x20] sm:$0xff]
    %v501 = vld [vmem:[#allocation9 + $0x28] sm:$0xff]
    %v502 = vld [vmem:[#allocation9 + $0x30] sm:$0xff]
    %v503 = vld [vmem:[#allocation9 + $0x38] sm:$0xff]
    %v504 = vld [vmem:[#allocation9 + $0x40] sm:$0xff]
    %v505 = vld [vmem:[#allocation9 + $0x48] sm:$0xff]
    %v506 = vld [vmem:[#allocation9 + $0x50] sm:$0xff]
    %v507 = vld [vmem:[#allocation9 + $0x58] sm:$0xff]
    %v508 = vld [vmem:[#allocation9 + $0x60] sm:$0xff]
    %v509 = vld [vmem:[#allocation9 + $0x68] sm:$0xff]
    %v510 = vld [vmem:[#allocation9 + $0x70] sm:$0xff]
    %v511 = vld [vmem:[#allocation9 + $0x78] sm:$0xff]
    %512 = vmatprep.subr.mxu0 0.0
    %513 = vmatpush1.msra.mxu0 %v496
    %514 = vmatprep.subr.mxu0 0.0
    %515 = vmatpush1.msra.mxu0 %v497
    %516 = vmatprep.subr.mxu0 0.0
    %517 = vmatpush1.msra.mxu0 %v498
    %518 = vmatprep.subr.mxu0 0.0
    %519 = vmatpush1.msra.mxu0 %v499
    %520 = vmatprep.subr.mxu0 0.0
    %521 = vmatpush1.msra.mxu0 %v500
    %522 = vmatprep.subr.mxu0 0.0
    %523 = vmatpush1.msra.mxu0 %v501
    %524 = vmatprep.subr.mxu0 0.0
    %525 = vmatpush1.msra.mxu0 %v502
    %526 = vmatprep.subr.mxu0 0.0
    %527 = vmatpush1.msra.mxu0 %v503
    %528 = vmatprep.subr.mxu0 0.0
    %529 = vmatpush1.msra.mxu0 %v504
    %530 = vmatprep.subr.mxu0 0.0
    %531 = vmatpush1.msra.mxu0 %v505
    %532 = vmatprep.subr.mxu0 0.0
    %533 = vmatpush1.msra.mxu0 %v506
    %534 = vmatprep.subr.mxu0 0.0
    %535 = vmatpush1.msra.mxu0 %v507
    %536 = vmatprep.subr.mxu0 0.0
    %537 = vmatpush1.msra.mxu0 %v508
    %538 = vmatprep.subr.mxu0 0.0
    %539 = vmatpush1.msra.mxu0 %v509
    %540 = vmatprep.subr.mxu0 0.0
    %541 = vmatpush1.msra.mxu0 %v510
    %542 = vmatprep.subr.mxu0 0.0
    %543 = vmatpush1.msra.mxu0 %v511
    %544 = vmatprep.subr.mxu0 0.0
    %545 = vmatpush1.msra.mxu0 0.0
    %546 = vmatprep.subr.mxu0 0.0
    %547 = vmatpush1.msra.mxu0 0.0
    %548 = vmatprep.subr.mxu0 0.0
    %549 = vmatpush1.msra.mxu0 0.0
    %550 = vmatprep.subr.mxu0 0.0
    %551 = vmatpush1.msra.mxu0 0.0
    %552 = vmatprep.subr.mxu0 0.0
    %553 = vmatpush1.msra.mxu0 0.0
    %554 = vmatprep.subr.mxu0 0.0
    %555 = vmatpush1.msra.mxu0 0.0
    %556 = vmatprep.subr.mxu0 0.0
    %557 = vmatpush1.msra.mxu0 0.0
    %558 = vmatprep.subr.mxu0 0.0
    %559 = vmatpush1.msra.mxu0 0.0
    %560 = vmatprep.subr.mxu0 0.0
    %561 = vmatpush1.msra.mxu0 0.0
    %562 = vmatprep.subr.mxu0 0.0
    %563 = vmatpush1.msra.mxu0 0.0
    %564 = vmatprep.subr.mxu0 0.0
    %565 = vmatpush1.msra.mxu0 0.0
    %566 = vmatprep.subr.mxu0 0.0
    %567 = vmatpush1.msra.mxu0 0.0
    %568 = vmatprep.subr.mxu0 0.0
    %569 = vmatpush1.msra.mxu0 0.0
    %570 = vmatprep.subr.mxu0 0.0
    %571 = vmatpush1.msra.mxu0 0.0
    %572 = vmatprep.subr.mxu0 0.0
    %573 = vmatpush1.msra.mxu0 0.0
    %574 = vmatprep.subr.mxu0 0.0
    %575 = vmatpush1.msra.mxu0 0.0
    %576 = vmatprep.mubr.f32.mxu0 0.0
    %577 = vmatmul.mubr.f32.gmra.mrb[0].mxu0 %v491
    %v578 = vpop.f32.mrb[0].mxu0
    %v579 = vadd.f32 0.0, %v578
    %v580 = vpop.f32.mrb[0].mxu0
    %581 = vdwg.mxu0
    %v582 = vadd.f32 %v495, %v579
    %v583 = vtanh.pop %v582
    %s584 = scalar_lea.vmem [#allocation10], 24
    %585 = vst [vmem:[%s584] sm:$0xff] %v583
    %s586 = scalar_lea.vmem [#allocation3], 32
    %v587 = vld [vmem:[%s586] sm:$0xff]
    %v588 = vld [vmem:[#allocation9] sm:$0xff]
    %v589 = vld [vmem:[#allocation9 + $0x8] sm:$0xff]
    %v590 = vld [vmem:[#allocation9 + $0x10] sm:$0xff]
    %v591 = vld [vmem:[#allocation9 + $0x18] sm:$0xff]
    %v592 = vld [vmem:[#allocation9 + $0x20] sm:$0xff]
    %v593 = vld [vmem:[#allocation9 + $0x28] sm:$0xff]
    %v594 = vld [vmem:[#allocation9 + $0x30] sm:$0xff]
    %v595 = vld [vmem:[#allocation9 + $0x38] sm:$0xff]
    %v596 = vld [vmem:[#allocation9 + $0x40] sm:$0xff]
    %v597 = vld [vmem:[#allocation9 + $0x48] sm:$0xff]
    %v598 = vld [vmem:[#allocation9 + $0x50] sm:$0xff]
    %v599 = vld [vmem:[#allocation9 + $0x58] sm:$0xff]
    %v600 = vld [vmem:[#allocation9 + $0x60] sm:$0xff]
    %v601 = vld [vmem:[#allocation9 + $0x68] sm:$0xff]
    %v602 = vld [vmem:[#allocation9 + $0x70] sm:$0xff]
    %v603 = vld [vmem:[#allocation9 + $0x78] sm:$0xff]
    %604 = vmatprep.subr.mxu0 0.0
    %605 = vmatpush1.msra.mxu0 %v588
    %606 = vmatprep.subr.mxu0 0.0
    %607 = vmatpush1.msra.mxu0 %v589
    %608 = vmatprep.subr.mxu0 0.0
    %609 = vmatpush1.msra.mxu0 %v590
    %610 = vmatprep.subr.mxu0 0.0
    %611 = vmatpush1.msra.mxu0 %v591
    %612 = vmatprep.subr.mxu0 0.0
    %613 = vmatpush1.msra.mxu0 %v592
    %614 = vmatprep.subr.mxu0 0.0
    %615 = vmatpush1.msra.mxu0 %v593
    %616 = vmatprep.subr.mxu0 0.0
    %617 = vmatpush1.msra.mxu0 %v594
    %618 = vmatprep.subr.mxu0 0.0
    %619 = vmatpush1.msra.mxu0 %v595
    %620 = vmatprep.subr.mxu0 0.0
    %621 = vmatpush1.msra.mxu0 %v596
    %622 = vmatprep.subr.mxu0 0.0
    %623 = vmatpush1.msra.mxu0 %v597
    %624 = vmatprep.subr.mxu0 0.0
    %625 = vmatpush1.msra.mxu0 %v598
    %626 = vmatprep.subr.mxu0 0.0
    %627 = vmatpush1.msra.mxu0 %v599
    %628 = vmatprep.subr.mxu0 0.0
    %629 = vmatpush1.msra.mxu0 %v600
    %630 = vmatprep.subr.mxu0 0.0
    %631 = vmatpush1.msra.mxu0 %v601
    %632 = vmatprep.subr.mxu0 0.0
    %633 = vmatpush1.msra.mxu0 %v602
    %634 = vmatprep.subr.mxu0 0.0
    %635 = vmatpush1.msra.mxu0 %v603
    %636 = vmatprep.subr.mxu0 0.0
    %637 = vmatpush1.msra.mxu0 0.0
    %638 = vmatprep.subr.mxu0 0.0
    %639 = vmatpush1.msra.mxu0 0.0
    %640 = vmatprep.subr.mxu0 0.0
    %641 = vmatpush1.msra.mxu0 0.0
    %642 = vmatprep.subr.mxu0 0.0
    %643 = vmatpush1.msra.mxu0 0.0
    %644 = vmatprep.subr.mxu0 0.0
    %645 = vmatpush1.msra.mxu0 0.0
    %646 = vmatprep.subr.mxu0 0.0
    %647 = vmatpush1.msra.mxu0 0.0
    %648 = vmatprep.subr.mxu0 0.0
    %649 = vmatpush1.msra.mxu0 0.0
    %650 = vmatprep.subr.mxu0 0.0
    %651 = vmatpush1.msra.mxu0 0.0
    %652 = vmatprep.subr.mxu0 0.0
    %653 = vmatpush1.msra.mxu0 0.0
    %654 = vmatprep.subr.mxu0 0.0
    %655 = vmatpush1.msra.mxu0 0.0
    %656 = vmatprep.subr.mxu0 0.0
    %657 = vmatpush1.msra.mxu0 0.0
    %658 = vmatprep.subr.mxu0 0.0
    %659 = vmatpush1.msra.mxu0 0.0
    %660 = vmatprep.subr.mxu0 0.0
    %661 = vmatpush1.msra.mxu0 0.0
    %662 = vmatprep.subr.mxu0 0.0
    %663 = vmatpush1.msra.mxu0 0.0
    %664 = vmatprep.subr.mxu0 0.0
    %665 = vmatpush1.msra.mxu0 0.0
    %666 = vmatprep.subr.mxu0 0.0
    %667 = vmatpush1.msra.mxu0 0.0
    %668 = vmatprep.mubr.f32.mxu0 0.0
    %669 = vmatmul.mubr.f32.gmra.mrb[0].mxu0 %v583
    %v670 = vpop.f32.mrb[0].mxu0
    %v671 = vadd.f32 0.0, %v670
    %v672 = vpop.f32.mrb[0].mxu0
    %673 = vdwg.mxu0
    %v674 = vadd.f32 %v587, %v671
    %v675 = vtanh.pop %v674
    %s676 = scalar_lea.vmem [#allocation10], 32
    %677 = vst [vmem:[%s676] sm:$0xff] %v675
    %s678 = scalar_lea.vmem [#allocation3], 40
    %v679 = vld [vmem:[%s678] sm:$0xff]
    %v680 = vld [vmem:[#allocation9] sm:$0xff]
    %v681 = vld [vmem:[#allocation9 + $0x8] sm:$0xff]
    %v682 = vld [vmem:[#allocation9 + $0x10] sm:$0xff]
    %v683 = vld [vmem:[#allocation9 + $0x18] sm:$0xff]
    %v684 = vld [vmem:[#allocation9 + $0x20] sm:$0xff]
    %v685 = vld [vmem:[#allocation9 + $0x28] sm:$0xff]
    %v686 = vld [vmem:[#allocation9 + $0x30] sm:$0xff]
    %v687 = vld [vmem:[#allocation9 + $0x38] sm:$0xff]
    %v688 = vld [vmem:[#allocation9 + $0x40] sm:$0xff]
    %v689 = vld [vmem:[#allocation9 + $0x48] sm:$0xff]
    %v690 = vld [vmem:[#allocation9 + $0x50] sm:$0xff]
    %v691 = vld [vmem:[#allocation9 + $0x58] sm:$0xff]
    %v692 = vld [vmem:[#allocation9 + $0x60] sm:$0xff]
    %v693 = vld [vmem:[#allocation9 + $0x68] sm:$0xff]
    %v694 = vld [vmem:[#allocation9 + $0x70] sm:$0xff]
    %v695 = vld [vmem:[#allocation9 + $0x78] sm:$0xff]
    %696 = vmatprep.subr.mxu0 0.0
    %697 = vmatpush1.msra.mxu0 %v680
    %698 = vmatprep.subr.mxu0 0.0
    %699 = vmatpush1.msra.mxu0 %v681
    %700 = vmatprep.subr.mxu0 0.0
    %701 = vmatpush1.msra.mxu0 %v682
    %702 = vmatprep.subr.mxu0 0.0
    %703 = vmatpush1.msra.mxu0 %v683
    %704 = vmatprep.subr.mxu0 0.0
    %705 = vmatpush1.msra.mxu0 %v684
    %706 = vmatprep.subr.mxu0 0.0
    %707 = vmatpush1.msra.mxu0 %v685
    %708 = vmatprep.subr.mxu0 0.0
    %709 = vmatpush1.msra.mxu0 %v686
    %710 = vmatprep.subr.mxu0 0.0
    %711 = vmatpush1.msra.mxu0 %v687
    %712 = vmatprep.subr.mxu0 0.0
    %713 = vmatpush1.msra.mxu0 %v688
    %714 = vmatprep.subr.mxu0 0.0
    %715 = vmatpush1.msra.mxu0 %v689
    %716 = vmatprep.subr.mxu0 0.0
    %717 = vmatpush1.msra.mxu0 %v690
    %718 = vmatprep.subr.mxu0 0.0
    %719 = vmatpush1.msra.mxu0 %v691
    %720 = vmatprep.subr.mxu0 0.0
    %721 = vmatpush1.msra.mxu0 %v692
    %722 = vmatprep.subr.mxu0 0.0
    %723 = vmatpush1.msra.mxu0 %v693
    %724 = vmatprep.subr.mxu0 0.0
    %725 = vmatpush1.msra.mxu0 %v694
    %726 = vmatprep.subr.mxu0 0.0
    %727 = vmatpush1.msra.mxu0 %v695
    %728 = vmatprep.subr.mxu0 0.0
    %729 = vmatpush1.msra.mxu0 0.0
    %730 = vmatprep.subr.mxu0 0.0
    %731 = vmatpush1.msra.mxu0 0.0
    %732 = vmatprep.subr.mxu0 0.0
    %733 = vmatpush1.msra.mxu0 0.0
    %734 = vmatprep.subr.mxu0 0.0
    %735 = vmatpush1.msra.mxu0 0.0
    %736 = vmatprep.subr.mxu0 0.0
    %737 = vmatpush1.msra.mxu0 0.0
    %738 = vmatprep.subr.mxu0 0.0
    %739 = vmatpush1.msra.mxu0 0.0
    %740 = vmatprep.subr.mxu0 0.0
    %741 = vmatpush1.msra.mxu0 0.0
    %742 = vmatprep.subr.mxu0 0.0
    %743 = vmatpush1.msra.mxu0 0.0
    %744 = vmatprep.subr.mxu0 0.0
    %745 = vmatpush1.msra.mxu0 0.0
    %746 = vmatprep.subr.mxu0 0.0
    %747 = vmatpush1.msra.mxu0 0.0
    %748 = vmatprep.subr.mxu0 0.0
    %749 = vmatpush1.msra.mxu0 0.0
    %750 = vmatprep.subr.mxu0 0.0
    %751 = vmatpush1.msra.mxu0 0.0
    %752 = vmatprep.subr.mxu0 0.0
    %753 = vmatpush1.msra.mxu0 0.0
    %754 = vmatprep.subr.mxu0 0.0
    %755 = vmatpush1.msra.mxu0 0.0
    %756 = vmatprep.subr.mxu0 0.0
    %757 = vmatpush1.msra.mxu0 0.0
    %758 = vmatprep.subr.mxu0 0.0
    %759 = vmatpush1.msra.mxu0 0.0
    %760 = vmatprep.mubr.f32.mxu0 0.0
    %761 = vmatmul.mubr.f32.gmra.mrb[0].mxu0 %v675
    %v762 = vpop.f32.mrb[0].mxu0
    %v763 = vadd.f32 0.0, %v762
    %v764 = vpop.f32.mrb[0].mxu0
    %765 = vdwg.mxu0
    %v766 = vadd.f32 %v679, %v763
    %v767 = vtanh.pop %v766
    %s768 = scalar_lea.vmem [#allocation10], 40
    %769 = vst [vmem:[%s768] sm:$0xff] %v767
    %s770 = scalar_lea.vmem [#allocation3], 48
    %v771 = vld [vmem:[%s770] sm:$0xff]
    %v772 = vld [vmem:[#allocation9] sm:$0xff]
    %v773 = vld [vmem:[#allocation9 + $0x8] sm:$0xff]
    %v774 = vld [vmem:[#allocation9 + $0x10] sm:$0xff]
    %v775 = vld [vmem:[#allocation9 + $0x18] sm:$0xff]
    %v776 = vld [vmem:[#allocation9 + $0x20] sm:$0xff]
    %v777 = vld [vmem:[#allocation9 + $0x28] sm:$0xff]
    %v778 = vld [vmem:[#allocation9 + $0x30] sm:$0xff]
    %v779 = vld [vmem:[#allocation9 + $0x38] sm:$0xff]
    %v780 = vld [vmem:[#allocation9 + $0x40] sm:$0xff]
    %v781 = vld [vmem:[#allocation9 + $0x48] sm:$0xff]
    %v782 = vld [vmem:[#allocation9 + $0x50] sm:$0xff]
    %v783 = vld [vmem:[#allocation9 + $0x58] sm:$0xff]
    %v784 = vld [vmem:[#allocation9 + $0x60] sm:$0xff]
    %v785 = vld [vmem:[#allocation9 + $0x68] sm:$0xff]
    %v786 = vld [vmem:[#allocation9 + $0x70] sm:$0xff]
    %v787 = vld [vmem:[#allocation9 + $0x78] sm:$0xff]
    %788 = vmatprep.subr.mxu0 0.0
    %789 = vmatpush1.msra.mxu0 %v772
    %790 = vmatprep.subr.mxu0 0.0
    %791 = vmatpush1.msra.mxu0 %v773
    %792 = vmatprep.subr.mxu0 0.0
    %793 = vmatpush1.msra.mxu0 %v774
    %794 = vmatprep.subr.mxu0 0.0
    %795 = vmatpush1.msra.mxu0 %v775
    %796 = vmatprep.subr.mxu0 0.0
    %797 = vmatpush1.msra.mxu0 %v776
    %798 = vmatprep.subr.mxu0 0.0
    %799 = vmatpush1.msra.mxu0 %v777
    %800 = vmatprep.subr.mxu0 0.0
    %801 = vmatpush1.msra.mxu0 %v778
    %802 = vmatprep.subr.mxu0 0.0
    %803 = vmatpush1.msra.mxu0 %v779
    %804 = vmatprep.subr.mxu0 0.0
    %805 = vmatpush1.msra.mxu0 %v780
    %806 = vmatprep.subr.mxu0 0.0
    %807 = vmatpush1.msra.mxu0 %v781
    %808 = vmatprep.subr.mxu0 0.0
    %809 = vmatpush1.msra.mxu0 %v782
    %810 = vmatprep.subr.mxu0 0.0
    %811 = vmatpush1.msra.mxu0 %v783
    %812 = vmatprep.subr.mxu0 0.0
    %813 = vmatpush1.msra.mxu0 %v784
    %814 = vmatprep.subr.mxu0 0.0
    %815 = vmatpush1.msra.mxu0 %v785
    %816 = vmatprep.subr.mxu0 0.0
    %817 = vmatpush1.msra.mxu0 %v786
    %818 = vmatprep.subr.mxu0 0.0
    %819 = vmatpush1.msra.mxu0 %v787
    %820 = vmatprep.subr.mxu0 0.0
    %821 = vmatpush1.msra.mxu0 0.0
    %822 = vmatprep.subr.mxu0 0.0
    %823 = vmatpush1.msra.mxu0 0.0
    %824 = vmatprep.subr.mxu0 0.0
    %825 = vmatpush1.msra.mxu0 0.0
    %826 = vmatprep.subr.mxu0 0.0
    %827 = vmatpush1.msra.mxu0 0.0
    %828 = vmatprep.subr.mxu0 0.0
    %829 = vmatpush1.msra.mxu0 0.0
    %830 = vmatprep.subr.mxu0 0.0
    %831 = vmatpush1.msra.mxu0 0.0
    %832 = vmatprep.subr.mxu0 0.0
    %833 = vmatpush1.msra.mxu0 0.0
    %834 = vmatprep.subr.mxu0 0.0
    %835 = vmatpush1.msra.mxu0 0.0
    %836 = vmatprep.subr.mxu0 0.0
    %837 = vmatpush1.msra.mxu0 0.0
    %838 = vmatprep.subr.mxu0 0.0
    %839 = vmatpush1.msra.mxu0 0.0
    %840 = vmatprep.subr.mxu0 0.0
    %841 = vmatpush1.msra.mxu0 0.0
    %842 = vmatprep.subr.mxu0 0.0
    %843 = vmatpush1.msra.mxu0 0.0
    %844 = vmatprep.subr.mxu0 0.0
    %845 = vmatpush1.msra.mxu0 0.0
    %846 = vmatprep.subr.mxu0 0.0
    %847 = vmatpush1.msra.mxu0 0.0
    %848 = vmatprep.subr.mxu0 0.0
    %849 = vmatpush1.msra.mxu0 0.0
    %850 = vmatprep.subr.mxu0 0.0
    %851 = vmatpush1.msra.mxu0 0.0
    %852 = vmatprep.mubr.f32.mxu0 0.0
    %853 = vmatmul.mubr.f32.gmra.mrb[0].mxu0 %v767
    %v854 = vpop.f32.mrb[0].mxu0
    %v855 = vadd.f32 0.0, %v854
    %v856 = vpop.f32.mrb[0].mxu0
    %857 = vdwg.mxu0
    %v858 = vadd.f32 %v771, %v855
    %v859 = vtanh.pop %v858
    %s860 = scalar_lea.vmem [#allocation10], 48
    %861 = vst [vmem:[%s860] sm:$0xff] %v859
    %s862 = scalar_lea.vmem [#allocation3], 56
    %v863 = vld [vmem:[%s862] sm:$0xff]
    %v864 = vld [vmem:[#allocation9] sm:$0xff]
    %v865 = vld [vmem:[#allocation9 + $0x8] sm:$0xff]
    %v866 = vld [vmem:[#allocation9 + $0x10] sm:$0xff]
    %v867 = vld [vmem:[#allocation9 + $0x18] sm:$0xff]
    %v868 = vld [vmem:[#allocation9 + $0x20] sm:$0xff]
    %v869 = vld [vmem:[#allocation9 + $0x28] sm:$0xff]
    %v870 = vld [vmem:[#allocation9 + $0x30] sm:$0xff]
    %v871 = vld [vmem:[#allocation9 + $0x38] sm:$0xff]
    %v872 = vld [vmem:[#allocation9 + $0x40] sm:$0xff]
    %v873 = vld [vmem:[#allocation9 + $0x48] sm:$0xff]
    %v874 = vld [vmem:[#allocation9 + $0x50] sm:$0xff]
    %v875 = vld [vmem:[#allocation9 + $0x58] sm:$0xff]
    %v876 = vld [vmem:[#allocation9 + $0x60] sm:$0xff]
    %v877 = vld [vmem:[#allocation9 + $0x68] sm:$0xff]
    %v878 = vld [vmem:[#allocation9 + $0x70] sm:$0xff]
    %v879 = vld [vmem:[#allocation9 + $0x78] sm:$0xff]
    %880 = vmatprep.subr.mxu0 0.0
    %881 = vmatpush1.msra.mxu0 %v864
    %882 = vmatprep.subr.mxu0 0.0
    %883 = vmatpush1.msra.mxu0 %v865
    %884 = vmatprep.subr.mxu0 0.0
    %885 = vmatpush1.msra.mxu0 %v866
    %886 = vmatprep.subr.mxu0 0.0
    %887 = vmatpush1.msra.mxu0 %v867
    %888 = vmatprep.subr.mxu0 0.0
    %889 = vmatpush1.msra.mxu0 %v868
    %890 = vmatprep.subr.mxu0 0.0
    %891 = vmatpush1.msra.mxu0 %v869
    %892 = vmatprep.subr.mxu0 0.0
    %893 = vmatpush1.msra.mxu0 %v870
    %894 = vmatprep.subr.mxu0 0.0
    %895 = vmatpush1.msra.mxu0 %v871
    %896 = vmatprep.subr.mxu0 0.0
    %897 = vmatpush1.msra.mxu0 %v872
    %898 = vmatprep.subr.mxu0 0.0
    %899 = vmatpush1.msra.mxu0 %v873
    %900 = vmatprep.subr.mxu0 0.0
    %901 = vmatpush1.msra.mxu0 %v874
    %902 = vmatprep.subr.mxu0 0.0
    %903 = vmatpush1.msra.mxu0 %v875
    %904 = vmatprep.subr.mxu0 0.0
    %905 = vmatpush1.msra.mxu0 %v876
    %906 = vmatprep.subr.mxu0 0.0
    %907 = vmatpush1.msra.mxu0 %v877
    %908 = vmatprep.subr.mxu0 0.0
    %909 = vmatpush1.msra.mxu0 %v878
    %910 = vmatprep.subr.mxu0 0.0
    %911 = vmatpush1.msra.mxu0 %v879
    %912 = vmatprep.subr.mxu0 0.0
    %913 = vmatpush1.msra.mxu0 0.0
    %914 = vmatprep.subr.mxu0 0.0
    %915 = vmatpush1.msra.mxu0 0.0
    %916 = vmatprep.subr.mxu0 0.0
    %917 = vmatpush1.msra.mxu0 0.0
    %918 = vmatprep.subr.mxu0 0.0
    %919 = vmatpush1.msra.mxu0 0.0
    %920 = vmatprep.subr.mxu0 0.0
    %921 = vmatpush1.msra.mxu0 0.0
    %922 = vmatprep.subr.mxu0 0.0
    %923 = vmatpush1.msra.mxu0 0.0
    %924 = vmatprep.subr.mxu0 0.0
    %925 = vmatpush1.msra.mxu0 0.0
    %926 = vmatprep.subr.mxu0 0.0
    %927 = vmatpush1.msra.mxu0 0.0
    %928 = vmatprep.subr.mxu0 0.0
    %929 = vmatpush1.msra.mxu0 0.0
    %930 = vmatprep.subr.mxu0 0.0
    %931 = vmatpush1.msra.mxu0 0.0
    %932 = vmatprep.subr.mxu0 0.0
    %933 = vmatpush1.msra.mxu0 0.0
    %934 = vmatprep.subr.mxu0 0.0
    %935 = vmatpush1.msra.mxu0 0.0
    %936 = vmatprep.subr.mxu0 0.0
    %937 = vmatpush1.msra.mxu0 0.0
    %938 = vmatprep.subr.mxu0 0.0
    %939 = vmatpush1.msra.mxu0 0.0
    %940 = vmatprep.subr.mxu0 0.0
    %941 = vmatpush1.msra.mxu0 0.0
    %942 = vmatprep.subr.mxu0 0.0
    %943 = vmatpush1.msra.mxu0 0.0
    %944 = vmatprep.mubr.f32.mxu0 0.0
    %945 = vmatmul.mubr.f32.gmra.mrb[0].mxu0 %v859
    %v946 = vpop.f32.mrb[0].mxu0
    %v947 = vadd.f32 0.0, %v946
    %v948 = vpop.f32.mrb[0].mxu0
    %949 = vdwg.mxu0
    %v950 = vadd.f32 %v863, %v947
    %v951 = vtanh.pop %v950
    %s952 = scalar_lea.vmem [#allocation10], 56
    %953 = vst [vmem:[%s952] sm:$0xff] %v951
    %954 = vst [vmem:[#allocation2] sm:$0xff] %v951
    // Predicated region
    $region34: #{tpu_custom_call.1} parent=1 // pred_check
      _
    $region35: #{tpu_custom_call.1} parent=1 // pred_check_branch
      %956 = sbr.rel (0) target = $region37
    $region36: #{tpu_custom_call.1} parent=1 // pred_region
      %s958 = ssub.s32 1024, 1024
      %959 = vsyncadd [#allocation6], %s958
      %s960 = sshll.u32 [#allocation10], 4
      %s961 = int_to_ptr.vmem [resolvable:$true] %s960
      %966 = dma.vmem_to_hbm [thread:$0]  %s961, 1024, %s4, [#allocation6], 128, 128, 8
    $region37: #{tpu_custom_call.1} parent=1 // pred_fallthru
      _
    // Predicated region
    $region38: #{tpu_custom_call.1} parent=1 // pred_check
      _
    $region39: #{tpu_custom_call.1} parent=1 // pred_check_branch
      %968 = sbr.rel (0) target = $region41
    $region40: #{tpu_custom_call.1} parent=1 // pred_region
      %969 = dma.done [#allocation6], 1024
    $region41: #{tpu_custom_call.1} parent=1 // pred_fallthru
      _
    %970 = vsyncpa [#allocation5], 1
    %971 = vsyncpa [#allocation8], 1
    %972 = vsyncpa [#allocation6], 1

</llo_original>
